<compile_context>
chip_gen: v5e
topology: v5e:2x2
jax: 0.10.0
libtpu: 0.0.40
codegen_flags: <defaults>
</compile_context>

<pallas_src>
import jax
import jax.numpy as jnp
from jax.experimental import pallas as pl
from jax.experimental.pallas import tpu as pltpu

LANE = 128
SUBLANE = 8


def _round_up(n, m):
    return ((n + m - 1) // m) * m


def mlp_kernel(x_ref,
               w1_ref, b1_ref,
               w2_ref, b2_ref,
               w3_ref, b3_ref,
               w4_ref, b4_ref,
               w5_ref, b5_ref,
               o_ref):
    """Fused 5-layer MLP on one batch tile, entirely in VMEM."""
    h = x_ref[...]  # already f32, no cast needed

    h = jnp.dot(h, w1_ref[...], preferred_element_type=jnp.float32) + b1_ref[...]
    h = jnp.maximum(h, 0.0)

    h = jnp.dot(h, w2_ref[...], preferred_element_type=jnp.float32) + b2_ref[...]
    h = jnp.maximum(h, 0.0)

    h = jnp.dot(h, w3_ref[...], preferred_element_type=jnp.float32) + b3_ref[...]
    h = jnp.maximum(h, 0.0)

    h = jnp.dot(h, w4_ref[...], preferred_element_type=jnp.float32) + b4_ref[...]
    h = jnp.maximum(h, 0.0)

    y = jnp.dot(h, w5_ref[...], preferred_element_type=jnp.float32) + b5_ref[...]
    o_ref[...] = y.astype(o_ref.dtype)


def complex_nn_forward(x, params, *, max_batch_tile=512):
    """x: [B, input_size] float32. params: dict of (w, b) per layer,
    w already transposed to [in, out], b shaped [1, out]."""
    B, in_size = x.shape
    out_size = params["w5"].shape[1]

    # ---- lane-pad every feature dim up to a multiple of 128 (zero fill) ----
    dims = [params["w1"].shape[0]] + [params[f"w{i}"].shape[1] for i in range(1, 6)]
    pdims = [_round_up(d, LANE) for d in dims]

    def pad2d(a, rows, cols):
        return jnp.pad(a, ((0, rows - a.shape[0]), (0, cols - a.shape[1])))

    padded = {}
    for i in range(1, 6):
        padded[f"w{i}"] = pad2d(params[f"w{i}"], pdims[i - 1], pdims[i])
        padded[f"b{i}"] = pad2d(params[f"b{i}"], 1, pdims[i])

    xp = pad2d(x, B, pdims[0])

    # ---- batch tiling: one big tile; pad B so every grid step is dense -----
    batch_tile = min(_round_up(B, SUBLANE), max_batch_tile)
    Bp = _round_up(B, batch_tile)
    if Bp != B:
        xp = jnp.pad(xp, ((0, Bp - B), (0, 0)))
    grid = (Bp // batch_tile,)

    # Weights/biases: full array = one resident block for every grid step.
    def full_spec(arr):
        return pl.BlockSpec(arr.shape, lambda i: (0, 0))

    in_specs = [pl.BlockSpec((batch_tile, pdims[0]), lambda i: (i, 0))]
    for name in ("w1", "b1", "w2", "b2", "w3", "b3", "w4", "b4", "w5", "b5"):
        in_specs.append(full_spec(padded[name]))

    out_spec = pl.BlockSpec((batch_tile, pdims[5]), lambda i: (i, 0))

    fn = pl.pallas_call(
        mlp_kernel,
        out_shape=jax.ShapeDtypeStruct((Bp, pdims[5]), jnp.float32),
        grid_spec=pltpu.PrefetchScalarGridSpec(
            num_scalar_prefetch=0,
            grid=grid,
            in_specs=in_specs,
            out_specs=out_spec,
        ),
        compiler_params=pltpu.CompilerParams(
            dimension_semantics=("parallel",)),
    )
    args = [xp] + [padded[n] for n in
                   ("w1", "b1", "w2", "b2", "w3", "b3", "w4", "b4", "w5", "b5")]
    out = fn(*args)
    # Slice off batch and lane padding.
    return out[:B, :out_size]


def init_params(key, input_size, hidden1, hidden2, output_size):
    """Deterministic synthetic init matching nn.Linear shapes.
    PyTorch stores weight as [out, in]; we keep the transposed [in, out] form."""
    dims = [(input_size, hidden1),   # fc1
            (hidden1, hidden2),      # fc2
            (hidden2, hidden2),      # fc3
            (hidden2, hidden1),      # fc4
            (hidden1, output_size)]  # fc5
    params = {}
    for idx, (fan_in, fan_out) in enumerate(dims, start=1):
        key, kw, kb = jax.random.split(key, 3)
        bound = 1.0 / jnp.sqrt(fan_in)
        params[f"w{idx}"] = jax.random.uniform(
            kw, (fan_in, fan_out), jnp.float32, -bound, bound)
        params[f"b{idx}"] = jax.random.uniform(
            kb, (1, fan_out), jnp.float32, -bound, bound)
    return params


def reference_forward(x, params):
    h = x
    for idx in range(1, 5):
        h = jnp.maximum(h @ params[f"w{idx}"] + params[f"b{idx}"], 0.0)
    return h @ params["w5"] + params["b5"]


if __name__ == "__main__":
    # Small shapes consistent with the module's forward (pure MLP on 2-D input).
    B, input_size, hidden1, hidden2, output_size = 16, 32, 64, 128, 16

    key = jax.random.PRNGKey(0)
    key, kx = jax.random.split(key)
    x = jax.random.normal(kx, (B, input_size), jnp.float32)
    params = init_params(key, input_size, hidden1, hidden2, output_size)

    out = complex_nn_forward(x, params)
    out = jax.block_until_ready(out)

    ref = reference_forward(x, params)
    assert out.shape == (B, output_size)
    assert jnp.allclose(out, ref, atol=1e-4, rtol=1e-4)

    print("KERNEL_OK")
</pallas_src>

<mosaic_0001>
module attributes {stable_mosaic.version = 11 : i64} {
  func.func @mlp_kernel(%arg0: i32, %arg1: memref<16x128xf32, #tpu.memory_space<vmem>>, %arg2: memref<128x128xf32, #tpu.memory_space<vmem>>, %arg3: memref<1x128xf32, #tpu.memory_space<vmem>>, %arg4: memref<128x128xf32, #tpu.memory_space<vmem>>, %arg5: memref<1x128xf32, #tpu.memory_space<vmem>>, %arg6: memref<128x128xf32, #tpu.memory_space<vmem>>, %arg7: memref<1x128xf32, #tpu.memory_space<vmem>>, %arg8: memref<128x128xf32, #tpu.memory_space<vmem>>, %arg9: memref<1x128xf32, #tpu.memory_space<vmem>>, %arg10: memref<128x128xf32, #tpu.memory_space<vmem>>, %arg11: memref<1x128xf32, #tpu.memory_space<vmem>>, %arg12: memref<16x128xf32, #tpu.memory_space<vmem>>) attributes {dimension_semantics = [#tpu.dimension_semantics<parallel>], iteration_bounds = array<i64: 1>, scalar_prefetch = 0 : i64, scratch_operands = 0 : i64, tpu.core_type = #tpu.core_type<tc>, window_params = [{transform_indices = @transform_0, window_bounds = array<i64: 16, 128>}, {pipeline_mode = #tpu.pipeline_mode<synchronous>, transform_indices = @transform_1, window_bounds = array<i64: 128, 128>}, {pipeline_mode = #tpu.pipeline_mode<synchronous>, transform_indices = @transform_2, window_bounds = array<i64: 1, 128>}, {pipeline_mode = #tpu.pipeline_mode<synchronous>, transform_indices = @transform_3, window_bounds = array<i64: 128, 128>}, {pipeline_mode = #tpu.pipeline_mode<synchronous>, transform_indices = @transform_4, window_bounds = array<i64: 1, 128>}, {pipeline_mode = #tpu.pipeline_mode<synchronous>, transform_indices = @transform_5, window_bounds = array<i64: 128, 128>}, {pipeline_mode = #tpu.pipeline_mode<synchronous>, transform_indices = @transform_6, window_bounds = array<i64: 1, 128>}, {pipeline_mode = #tpu.pipeline_mode<synchronous>, transform_indices = @transform_7, window_bounds = array<i64: 128, 128>}, {pipeline_mode = #tpu.pipeline_mode<synchronous>, transform_indices = @transform_8, window_bounds = array<i64: 1, 128>}, {pipeline_mode = #tpu.pipeline_mode<synchronous>, transform_indices = @transform_9, window_bounds = array<i64: 128, 128>}, {pipeline_mode = #tpu.pipeline_mode<synchronous>, transform_indices = @transform_10, window_bounds = array<i64: 1, 128>}, {transform_indices = @transform_11, window_bounds = array<i64: 16, 128>}]} {
    %c0 = arith.constant 0 : index
    %c0_0 = arith.constant 0 : index
    %0 = vector.load %arg1[%c0, %c0_0] : memref<16x128xf32, #tpu.memory_space<vmem>>, vector<16x128xf32>
    %c0_1 = arith.constant 0 : index
    %c0_2 = arith.constant 0 : index
    %1 = vector.load %arg2[%c0_1, %c0_2] : memref<128x128xf32, #tpu.memory_space<vmem>>, vector<128x128xf32>
    %cst = arith.constant dense<0.000000e+00> : vector<16x128xf32>
    %2 = tpu.matmul %0, %1, %cst {dimension_numbers = #tpu.dot_dimension_numbers<[1], [0], [0], [1], [0, 0, 1, 1], [], []>} : vector<16x128xf32>, vector<128x128xf32>, vector<16x128xf32> -> vector<16x128xf32>
    %c0_3 = arith.constant 0 : index
    %c0_4 = arith.constant 0 : index
    %3 = vector.load %arg3[%c0_3, %c0_4] : memref<1x128xf32, #tpu.memory_space<vmem>>, vector<1x128xf32>
    %4 = vector.broadcast %3 : vector<1x128xf32> to vector<16x128xf32>
    %5 = arith.addf %2, %4 : vector<16x128xf32>
    %cst_5 = arith.constant 0.000000e+00 : f32
    %6 = vector.broadcast %cst_5 : f32 to vector<16x128xf32>
    %7 = arith.maximumf %5, %6 : vector<16x128xf32>
    %c0_6 = arith.constant 0 : index
    %c0_7 = arith.constant 0 : index
    %8 = vector.load %arg4[%c0_6, %c0_7] : memref<128x128xf32, #tpu.memory_space<vmem>>, vector<128x128xf32>
    %cst_8 = arith.constant dense<0.000000e+00> : vector<16x128xf32>
    %9 = tpu.matmul %7, %8, %cst_8 {dimension_numbers = #tpu.dot_dimension_numbers<[1], [0], [0], [1], [0, 0, 1, 1], [], []>} : vector<16x128xf32>, vector<128x128xf32>, vector<16x128xf32> -> vector<16x128xf32>
    %c0_9 = arith.constant 0 : index
    %c0_10 = arith.constant 0 : index
    %10 = vector.load %arg5[%c0_9, %c0_10] : memref<1x128xf32, #tpu.memory_space<vmem>>, vector<1x128xf32>
    %11 = vector.broadcast %10 : vector<1x128xf32> to vector<16x128xf32>
    %12 = arith.addf %9, %11 : vector<16x128xf32>
    %cst_11 = arith.constant 0.000000e+00 : f32
    %13 = vector.broadcast %cst_11 : f32 to vector<16x128xf32>
    %14 = arith.maximumf %12, %13 : vector<16x128xf32>
    %c0_12 = arith.constant 0 : index
    %c0_13 = arith.constant 0 : index
    %15 = vector.load %arg6[%c0_12, %c0_13] : memref<128x128xf32, #tpu.memory_space<vmem>>, vector<128x128xf32>
    %cst_14 = arith.constant dense<0.000000e+00> : vector<16x128xf32>
    %16 = tpu.matmul %14, %15, %cst_14 {dimension_numbers = #tpu.dot_dimension_numbers<[1], [0], [0], [1], [0, 0, 1, 1], [], []>} : vector<16x128xf32>, vector<128x128xf32>, vector<16x128xf32> -> vector<16x128xf32>
    %c0_15 = arith.constant 0 : index
    %c0_16 = arith.constant 0 : index
    %17 = vector.load %arg7[%c0_15, %c0_16] : memref<1x128xf32, #tpu.memory_space<vmem>>, vector<1x128xf32>
    %18 = vector.broadcast %17 : vector<1x128xf32> to vector<16x128xf32>
    %19 = arith.addf %16, %18 : vector<16x128xf32>
    %cst_17 = arith.constant 0.000000e+00 : f32
    %20 = vector.broadcast %cst_17 : f32 to vector<16x128xf32>
    %21 = arith.maximumf %19, %20 : vector<16x128xf32>
    %c0_18 = arith.constant 0 : index
    %c0_19 = arith.constant 0 : index
    %22 = vector.load %arg8[%c0_18, %c0_19] : memref<128x128xf32, #tpu.memory_space<vmem>>, vector<128x128xf32>
    %cst_20 = arith.constant dense<0.000000e+00> : vector<16x128xf32>
    %23 = tpu.matmul %21, %22, %cst_20 {dimension_numbers = #tpu.dot_dimension_numbers<[1], [0], [0], [1], [0, 0, 1, 1], [], []>} : vector<16x128xf32>, vector<128x128xf32>, vector<16x128xf32> -> vector<16x128xf32>
    %c0_21 = arith.constant 0 : index
    %c0_22 = arith.constant 0 : index
    %24 = vector.load %arg9[%c0_21, %c0_22] : memref<1x128xf32, #tpu.memory_space<vmem>>, vector<1x128xf32>
    %25 = vector.broadcast %24 : vector<1x128xf32> to vector<16x128xf32>
    %26 = arith.addf %23, %25 : vector<16x128xf32>
    %cst_23 = arith.constant 0.000000e+00 : f32
    %27 = vector.broadcast %cst_23 : f32 to vector<16x128xf32>
    %28 = arith.maximumf %26, %27 : vector<16x128xf32>
    %c0_24 = arith.constant 0 : index
    %c0_25 = arith.constant 0 : index
    %29 = vector.load %arg10[%c0_24, %c0_25] : memref<128x128xf32, #tpu.memory_space<vmem>>, vector<128x128xf32>
    %cst_26 = arith.constant dense<0.000000e+00> : vector<16x128xf32>
    %30 = tpu.matmul %28, %29, %cst_26 {dimension_numbers = #tpu.dot_dimension_numbers<[1], [0], [0], [1], [0, 0, 1, 1], [], []>} : vector<16x128xf32>, vector<128x128xf32>, vector<16x128xf32> -> vector<16x128xf32>
    %c0_27 = arith.constant 0 : index
    %c0_28 = arith.constant 0 : index
    %31 = vector.load %arg11[%c0_27, %c0_28] : memref<1x128xf32, #tpu.memory_space<vmem>>, vector<1x128xf32>
    %32 = vector.broadcast %31 : vector<1x128xf32> to vector<16x128xf32>
    %33 = arith.addf %30, %32 : vector<16x128xf32>
    %c0_29 = arith.constant 0 : index
    %c0_30 = arith.constant 0 : index
    %34 = vector.load %arg12[%c0_29, %c0_30] : memref<16x128xf32, #tpu.memory_space<vmem>>, vector<16x128xf32>
    tpu.vector_store %arg12[%c0_29, %c0_30], %33 {strides = array<i32>} : memref<16x128xf32, #tpu.memory_space<vmem>>, vector<16x128xf32>,
    return
  }
  func.func @transform_0(%arg0: i32) -> (i32, i32) {
    %c0_i32 = arith.constant 0 : i32
    %c0_i32_0 = arith.constant 0 : i32
    return %arg0, %c0_i32 : i32, i32
  }
  func.func @transform_1(%arg0: i32) -> (i32, i32) {
    %c0_i32 = arith.constant 0 : i32
    %c0_i32_0 = arith.constant 0 : i32
    %c0_i32_1 = arith.constant 0 : i32
    return %c0_i32, %c0_i32_0 : i32, i32
  }
  func.func @transform_2(%arg0: i32) -> (i32, i32) {
    %c0_i32 = arith.constant 0 : i32
    %c0_i32_0 = arith.constant 0 : i32
    %c0_i32_1 = arith.constant 0 : i32
    return %c0_i32, %c0_i32_0 : i32, i32
  }
  func.func @transform_3(%arg0: i32) -> (i32, i32) {
    %c0_i32 = arith.constant 0 : i32
    %c0_i32_0 = arith.constant 0 : i32
    %c0_i32_1 = arith.constant 0 : i32
    return %c0_i32, %c0_i32_0 : i32, i32
  }
  func.func @transform_4(%arg0: i32) -> (i32, i32) {
    %c0_i32 = arith.constant 0 : i32
    %c0_i32_0 = arith.constant 0 : i32
    %c0_i32_1 = arith.constant 0 : i32
    return %c0_i32, %c0_i32_0 : i32, i32
  }
  func.func @transform_5(%arg0: i32) -> (i32, i32) {
    %c0_i32 = arith.constant 0 : i32
    %c0_i32_0 = arith.constant 0 : i32
    %c0_i32_1 = arith.constant 0 : i32
    return %c0_i32, %c0_i32_0 : i32, i32
  }
  func.func @transform_6(%arg0: i32) -> (i32, i32) {
    %c0_i32 = arith.constant 0 : i32
    %c0_i32_0 = arith.constant 0 : i32
    %c0_i32_1 = arith.constant 0 : i32
    return %c0_i32, %c0_i32_0 : i32, i32
  }
  func.func @transform_7(%arg0: i32) -> (i32, i32) {
    %c0_i32 = arith.constant 0 : i32
    %c0_i32_0 = arith.constant 0 : i32
    %c0_i32_1 = arith.constant 0 : i32
    return %c0_i32, %c0_i32_0 : i32, i32
  }
  func.func @transform_8(%arg0: i32) -> (i32, i32) {
    %c0_i32 = arith.constant 0 : i32
    %c0_i32_0 = arith.constant 0 : i32
    %c0_i32_1 = arith.constant 0 : i32
    return %c0_i32, %c0_i32_0 : i32, i32
  }
  func.func @transform_9(%arg0: i32) -> (i32, i32) {
    %c0_i32 = arith.constant 0 : i32
    %c0_i32_0 = arith.constant 0 : i32
    %c0_i32_1 = arith.constant 0 : i32
    return %c0_i32, %c0_i32_0 : i32, i32
  }
  func.func @transform_10(%arg0: i32) -> (i32, i32) {
    %c0_i32 = arith.constant 0 : i32
    %c0_i32_0 = arith.constant 0 : i32
    %c0_i32_1 = arith.constant 0 : i32
    return %c0_i32, %c0_i32_0 : i32, i32
  }
  func.func @transform_11(%arg0: i32) -> (i32, i32) {
    %c0_i32 = arith.constant 0 : i32
    %c0_i32_0 = arith.constant 0 : i32
    return %arg0, %c0_i32 : i32, i32
  }
}

</mosaic_0001>

<llo_original>
// kernel: tpu_custom_call.1
$region0: #{tpu_custom_call.1}
  #allocation0 [shape = 'u32[]', space=smem, size = 0x4, offset = 0x4, fixed_abs, tag = 'smem constant byte address 0x4 - core index']
  #allocation1 [shape = 'u32[72,128]{1,0:T(1,128)}', space=vmem, size = 0x9000, scoped, tag = 'internal scratch']
  %s0 = inlined_call_operand.hbm [shape: f32[16,128], index: 0, kind: input, shape index: {}]
  %s1 = inlined_call_operand.hbm [shape: f32[128,128], index: 1, kind: input, shape index: {}]
  %s2 = inlined_call_operand.vmem [shape: f32[1,128], index: 2, kind: input, shape index: {}]
  %s3 = inlined_call_operand.hbm [shape: f32[128,128], index: 3, kind: input, shape index: {}]
  %s4 = inlined_call_operand.vmem [shape: f32[1,128], index: 4, kind: input, shape index: {}]
  %s5 = inlined_call_operand.hbm [shape: f32[128,128], index: 5, kind: input, shape index: {}]
  %s6 = inlined_call_operand.vmem [shape: f32[1,128], index: 6, kind: input, shape index: {}]
  %s7 = inlined_call_operand.hbm [shape: f32[128,128], index: 7, kind: input, shape index: {}]
  %s8 = inlined_call_operand.vmem [shape: f32[1,128], index: 8, kind: input, shape index: {}]
  %s9 = inlined_call_operand.hbm [shape: f32[128,128], index: 9, kind: input, shape index: {}]
  %s10 = inlined_call_operand.vmem [shape: f32[1,128], index: 10, kind: input, shape index: {}]
  %s11 = inlined_call_operand.hbm [shape: f32[16,128], index: 11, kind: output, shape index: {}]
  %s12 = sld [smem:[#allocation0]]
  $region78: #{tpu_custom_call.1} parent=0
    _
  %s14 = ssub.s32 1, %s12
  %s15 = scalar_select 0, %s14, %s12
  $region1: #{tpu_custom_call.1} parent=0
    #allocation2 [shape = 'u8[8192]{0}', space=vmem, size = 0x2000, scoped, tag = 'input window, operand 0, single buffered']
    #allocation3 [shape = 's32[1]{0}', space=sflag, size = 0x4, scoped, tag = 'scoped memory for tpu_custom_call.1']
    #allocation4 [shape = 's32[1]{0}', space=sflag, size = 0x4, scoped, tag = 'scoped memory for tpu_custom_call.1']
    #allocation5 [shape = 'u8[65536]{0}', space=vmem, size = 0x10000, scoped, tag = 'input window, operand 1, single buffered']
    #allocation6 [shape = 's32[1]{0}', space=sflag, size = 0x4, scoped, tag = 'scoped memory for tpu_custom_call.1']
    #allocation7 [shape = 'u8[65536]{0}', space=vmem, size = 0x10000, scoped, tag = 'input window, operand 3, single buffered']
    #allocation8 [shape = 'u8[65536]{0}', space=vmem, size = 0x10000, scoped, tag = 'input window, operand 5, single buffered']
    #allocation9 [shape = 's32[1]{0}', space=sflag, size = 0x4, scoped, tag = 'scoped memory for tpu_custom_call.1']
    #allocation10 [shape = 'u8[65536]{0}', space=vmem, size = 0x10000, scoped, tag = 'input window, operand 7, single buffered']
    #allocation11 [shape = 'u8[65536]{0}', space=vmem, size = 0x10000, scoped, tag = 'input window, operand 9, single buffered']
    #allocation12 [shape = 's32[1]{0}', space=sflag, size = 0x4, scoped, tag = 'scoped memory for tpu_custom_call.1']
    #allocation13 [shape = 'u8[8192]{0}', space=vmem, size = 0x2000, scoped, tag = 'output window, operand 0, single buffered']
    %16 = vsyncpa [#allocation3], 0
    %17 = vsyncpa [#allocation6], 0
    %18 = vsyncpa [#allocation9], 0
    %19 = vsyncpa [#allocation12], 0
    %20 = vsyncpa [#allocation4], 0
    // Predicated region
    $region2: #{tpu_custom_call.1} parent=1 // pred_check
      _
    $region3: #{tpu_custom_call.1} parent=1 // pred_check_branch
      %22 = sbr.rel (0) target = $region5
    $region4: #{tpu_custom_call.1} parent=1 // pred_region
      %24 = vsyncadd [#allocation3], 0
      %s25 = sshll.u32 %s0, 4
      %s26 = int_to_ptr.hbm [resolvable:$true] %s25
      %s27 = sshll.u32 [#allocation2], 4
      %s28 = int_to_ptr.vmem [resolvable:$true] %s27
      %33 = dma.hbm_to_vmem [thread:$0]  %s26, 256, %s28, [#allocation3], 128, 128, 8
    $region5: #{tpu_custom_call.1} parent=1 // pred_fallthru
      _
    // Predicated region
    $region6: #{tpu_custom_call.1} parent=1 // pred_check
      _
    $region7: #{tpu_custom_call.1} parent=1 // pred_check_branch
      %35 = sbr.rel (0) target = $region9
    $region8: #{tpu_custom_call.1} parent=1 // pred_region
      %37 = vsyncadd [#allocation6], 0
      %s38 = sshll.u32 %s1, 4
      %s39 = int_to_ptr.hbm [resolvable:$true] %s38
      %s40 = sshll.u32 [#allocation5], 4
      %s41 = int_to_ptr.vmem [resolvable:$true] %s40
      %46 = dma.hbm_to_vmem [thread:$0]  %s39, 2048, %s41, [#allocation6], 128, 128, 8
    $region9: #{tpu_custom_call.1} parent=1 // pred_fallthru
      _
    // Predicated region
    $region10: #{tpu_custom_call.1} parent=1 // pred_check
      _
    $region11: #{tpu_custom_call.1} parent=1 // pred_check_branch
      %48 = sbr.rel (0) target = $region13
    $region12: #{tpu_custom_call.1} parent=1 // pred_region
      _
    $region13: #{tpu_custom_call.1} parent=1 // pred_fallthru
      _
    // Predicated region
    $region14: #{tpu_custom_call.1} parent=1 // pred_check
      _
    $region15: #{tpu_custom_call.1} parent=1 // pred_check_branch
      %50 = sbr.rel (0) target = $region17
    $region16: #{tpu_custom_call.1} parent=1 // pred_region
      %52 = vsyncadd [#allocation6], 0
      %s53 = sshll.u32 %s3, 4
      %s54 = int_to_ptr.hbm [resolvable:$true] %s53
      %s55 = sshll.u32 [#allocation7], 4
      %s56 = int_to_ptr.vmem [resolvable:$true] %s55
      %61 = dma.hbm_to_vmem [thread:$0]  %s54, 2048, %s56, [#allocation6], 128, 128, 8
    $region17: #{tpu_custom_call.1} parent=1 // pred_fallthru
      _
    // Predicated region
    $region18: #{tpu_custom_call.1} parent=1 // pred_check
      _
    $region19: #{tpu_custom_call.1} parent=1 // pred_check_branch
      %63 = sbr.rel (0) target = $region21
    $region20: #{tpu_custom_call.1} parent=1 // pred_region
      _
    $region21: #{tpu_custom_call.1} parent=1 // pred_fallthru
      _
    // Predicated region
    $region22: #{tpu_custom_call.1} parent=1 // pred_check
      _
    $region23: #{tpu_custom_call.1} parent=1 // pred_check_branch
      %65 = sbr.rel (0) target = $region25
    $region24: #{tpu_custom_call.1} parent=1 // pred_region
      %67 = vsyncadd [#allocation9], 0
      %s68 = sshll.u32 %s5, 4
      %s69 = int_to_ptr.hbm [resolvable:$true] %s68
      %s70 = sshll.u32 [#allocation8], 4
      %s71 = int_to_ptr.vmem [resolvable:$true] %s70
      %76 = dma.hbm_to_vmem [thread:$0]  %s69, 2048, %s71, [#allocation9], 128, 128, 8
    $region25: #{tpu_custom_call.1} parent=1 // pred_fallthru
      _
    // Predicated region
    $region26: #{tpu_custom_call.1} parent=1 // pred_check
      _
    $region27: #{tpu_custom_call.1} parent=1 // pred_check_branch
      %78 = sbr.rel (0) target = $region29
    $region28: #{tpu_custom_call.1} parent=1 // pred_region
      _
    $region29: #{tpu_custom_call.1} parent=1 // pred_fallthru
      _
    // Predicated region
    $region30: #{tpu_custom_call.1} parent=1 // pred_check
      _
    $region31: #{tpu_custom_call.1} parent=1 // pred_check_branch
      %80 = sbr.rel (0) target = $region33
    $region32: #{tpu_custom_call.1} parent=1 // pred_region
      %82 = vsyncadd [#allocation9], 0
      %s83 = sshll.u32 %s7, 4
      %s84 = int_to_ptr.hbm [resolvable:$true] %s83
      %s85 = sshll.u32 [#allocation10], 4
      %s86 = int_to_ptr.vmem [resolvable:$true] %s85
      %91 = dma.hbm_to_vmem [thread:$0]  %s84, 2048, %s86, [#allocation9], 128, 128, 8
    $region33: #{tpu_custom_call.1} parent=1 // pred_fallthru
      _
    // Predicated region
    $region34: #{tpu_custom_call.1} parent=1 // pred_check
      _
    $region35: #{tpu_custom_call.1} parent=1 // pred_check_branch
      %93 = sbr.rel (0) target = $region37
    $region36: #{tpu_custom_call.1} parent=1 // pred_region
      _
    $region37: #{tpu_custom_call.1} parent=1 // pred_fallthru
      _
    // Predicated region
    $region38: #{tpu_custom_call.1} parent=1 // pred_check
      _
    $region39: #{tpu_custom_call.1} parent=1 // pred_check_branch
      %95 = sbr.rel (0) target = $region41
    $region40: #{tpu_custom_call.1} parent=1 // pred_region
      %97 = vsyncadd [#allocation12], 0
      %s98 = sshll.u32 %s9, 4
      %s99 = int_to_ptr.hbm [resolvable:$true] %s98
      %s100 = sshll.u32 [#allocation11], 4
      %s101 = int_to_ptr.vmem [resolvable:$true] %s100
      %106 = dma.hbm_to_vmem [thread:$0]  %s99, 2048, %s101, [#allocation12], 128, 128, 8
    $region41: #{tpu_custom_call.1} parent=1 // pred_fallthru
      _
    // Predicated region
    $region42: #{tpu_custom_call.1} parent=1 // pred_check
      _
    $region43: #{tpu_custom_call.1} parent=1 // pred_check_branch
      %108 = sbr.rel (0) target = $region45
    $region44: #{tpu_custom_call.1} parent=1 // pred_region
      _
    $region45: #{tpu_custom_call.1} parent=1 // pred_fallthru
      _
    // Predicated region
    $region46: #{tpu_custom_call.1} parent=1 // pred_check
      _
    $region47: #{tpu_custom_call.1} parent=1 // pred_check_branch
      %110 = sbr.rel (0) target = $region49
    $region48: #{tpu_custom_call.1} parent=1 // pred_region
      %112 = dma.done [#allocation3], 256
    $region49: #{tpu_custom_call.1} parent=1 // pred_fallthru
      _
    // Predicated region
    $region50: #{tpu_custom_call.1} parent=1 // pred_check
      _
    $region51: #{tpu_custom_call.1} parent=1 // pred_check_branch
      %114 = sbr.rel (0) target = $region53
    $region52: #{tpu_custom_call.1} parent=1 // pred_region
      %116 = dma.done [#allocation6], 2048
    $region53: #{tpu_custom_call.1} parent=1 // pred_fallthru
      _
    // Predicated region
    $region54: #{tpu_custom_call.1} parent=1 // pred_check
      _
    $region55: #{tpu_custom_call.1} parent=1 // pred_check_branch
      %118 = sbr.rel (0) target = $region57
    $region56: #{tpu_custom_call.1} parent=1 // pred_region
      %120 = dma.done [#allocation6], 2048
    $region57: #{tpu_custom_call.1} parent=1 // pred_fallthru
      _
    // Predicated region
    $region58: #{tpu_custom_call.1} parent=1 // pred_check
      _
    $region59: #{tpu_custom_call.1} parent=1 // pred_check_branch
      %122 = sbr.rel (0) target = $region61
    $region60: #{tpu_custom_call.1} parent=1 // pred_region
      %124 = dma.done [#allocation9], 2048
    $region61: #{tpu_custom_call.1} parent=1 // pred_fallthru
      _
    // Predicated region
    $region62: #{tpu_custom_call.1} parent=1 // pred_check
      _
    $region63: #{tpu_custom_call.1} parent=1 // pred_check_branch
      %126 = sbr.rel (0) target = $region65
    $region64: #{tpu_custom_call.1} parent=1 // pred_region
      %128 = dma.done [#allocation9], 2048
    $region65: #{tpu_custom_call.1} parent=1 // pred_fallthru
      _
    // Predicated region
    $region66: #{tpu_custom_call.1} parent=1 // pred_check
      _
    $region67: #{tpu_custom_call.1} parent=1 // pred_check_branch
      %130 = sbr.rel (0) target = $region69
    $region68: #{tpu_custom_call.1} parent=1 // pred_region
      %132 = dma.done [#allocation12], 2048
    $region69: #{tpu_custom_call.1} parent=1 // pred_fallthru
      _
    %v133 = vld [vmem:[#allocation2] sm:$0xff]
    %v134 = vld [vmem:[#allocation2 + $0x8] sm:$0xff]
    %v135 = vld [vmem:[#allocation5] sm:$0xff]
    %v136 = vld [vmem:[#allocation5 + $0x8] sm:$0xff]
    %v137 = vld [vmem:[#allocation5 + $0x10] sm:$0xff]
    %v138 = vld [vmem:[#allocation5 + $0x18] sm:$0xff]
    %v139 = vld [vmem:[#allocation5 + $0x20] sm:$0xff]
    %v140 = vld [vmem:[#allocation5 + $0x28] sm:$0xff]
    %v141 = vld [vmem:[#allocation5 + $0x30] sm:$0xff]
    %v142 = vld [vmem:[#allocation5 + $0x38] sm:$0xff]
    %v143 = vld [vmem:[#allocation5 + $0x40] sm:$0xff]
    %v144 = vld [vmem:[#allocation5 + $0x48] sm:$0xff]
    %v145 = vld [vmem:[#allocation5 + $0x50] sm:$0xff]
    %v146 = vld [vmem:[#allocation5 + $0x58] sm:$0xff]
    %v147 = vld [vmem:[#allocation5 + $0x60] sm:$0xff]
    %v148 = vld [vmem:[#allocation5 + $0x68] sm:$0xff]
    %v149 = vld [vmem:[#allocation5 + $0x70] sm:$0xff]
    %v150 = vld [vmem:[#allocation5 + $0x78] sm:$0xff]
    %v151 = vld [vmem:[%s2] sm:$0x1]
    %v153 = vperm.slane %v151, 0
    %155 = vmatpush.msra.mxu0 %v150
    %156 = vmatpush.msra.mxu0 %v149
    %157 = vmatpush.msra.mxu0 %v148
    %158 = vmatpush.msra.mxu0 %v147
    %159 = vmatpush.msra.mxu0 %v146
    %160 = vmatpush.msra.mxu0 %v145
    %161 = vmatpush.msra.mxu0 %v144
    %162 = vmatpush.msra.mxu0 %v143
    %163 = vmatpush.msra.mxu0 %v142
    %164 = vmatpush.msra.mxu0 %v141
    %165 = vmatpush.msra.mxu0 %v140
    %166 = vmatpush.msra.mxu0 %v139
    %167 = vmatpush.msra.mxu0 %v138
    %168 = vmatpush.msra.mxu0 %v137
    %169 = vmatpush.msra.mxu0 %v136
    %170 = vmatpush.msra.mxu0 %v135
    %171 = vmatmul.f32.gmra.mxu0 %v133
    %v172 = vpop.f32.mrf.mxu0
    %v173 = vadd.f32 %v153, %v172
    %174 = vmatmul.f32.gmra.mxu0 %v134
    %v175 = vpop.f32.mrf.mxu0
    %v176 = vadd.f32 %v153, %v175
    %177 = vdwg.mxu0
    %v178 = vmax.f32 %v173, 0.0
    %v179 = vmax.f32 %v176, 0.0
    %v180 = vld [vmem:[#allocation7] sm:$0xff]
    %v181 = vld [vmem:[#allocation7 + $0x8] sm:$0xff]
    %v182 = vld [vmem:[#allocation7 + $0x10] sm:$0xff]
    %v183 = vld [vmem:[#allocation7 + $0x18] sm:$0xff]
    %v184 = vld [vmem:[#allocation7 + $0x20] sm:$0xff]
    %v185 = vld [vmem:[#allocation7 + $0x28] sm:$0xff]
    %v186 = vld [vmem:[#allocation7 + $0x30] sm:$0xff]
    %v187 = vld [vmem:[#allocation7 + $0x38] sm:$0xff]
    %v188 = vld [vmem:[#allocation7 + $0x40] sm:$0xff]
    %v189 = vld [vmem:[#allocation7 + $0x48] sm:$0xff]
    %v190 = vld [vmem:[#allocation7 + $0x50] sm:$0xff]
    %v191 = vld [vmem:[#allocation7 + $0x58] sm:$0xff]
    %v192 = vld [vmem:[#allocation7 + $0x60] sm:$0xff]
    %v193 = vld [vmem:[#allocation7 + $0x68] sm:$0xff]
    %v194 = vld [vmem:[#allocation7 + $0x70] sm:$0xff]
    %v195 = vld [vmem:[#allocation7 + $0x78] sm:$0xff]
    %v196 = vld [vmem:[%s4] sm:$0x1]
    %v198 = vperm.slane %v196, 0
    %200 = vmatpush.msra.mxu0 %v195
    %201 = vmatpush.msra.mxu0 %v194
    %202 = vmatpush.msra.mxu0 %v193
    %203 = vmatpush.msra.mxu0 %v192
    %204 = vmatpush.msra.mxu0 %v191
    %205 = vmatpush.msra.mxu0 %v190
    %206 = vmatpush.msra.mxu0 %v189
    %207 = vmatpush.msra.mxu0 %v188
    %208 = vmatpush.msra.mxu0 %v187
    %209 = vmatpush.msra.mxu0 %v186
    %210 = vmatpush.msra.mxu0 %v185
    %211 = vmatpush.msra.mxu0 %v184
    %212 = vmatpush.msra.mxu0 %v183
    %213 = vmatpush.msra.mxu0 %v182
    %214 = vmatpush.msra.mxu0 %v181
    %215 = vmatpush.msra.mxu0 %v180
    %216 = vmatmul.f32.gmra.mxu0 %v178
    %v217 = vpop.f32.mrf.mxu0
    %v218 = vadd.f32 %v198, %v217
    %219 = vmatmul.f32.gmra.mxu0 %v179
    %v220 = vpop.f32.mrf.mxu0
    %v221 = vadd.f32 %v198, %v220
    %222 = vdwg.mxu0
    %v223 = vmax.f32 %v218, 0.0
    %v224 = vmax.f32 %v221, 0.0
    %v225 = vld [vmem:[#allocation8] sm:$0xff]
    %v226 = vld [vmem:[#allocation8 + $0x8] sm:$0xff]
    %v227 = vld [vmem:[#allocation8 + $0x10] sm:$0xff]
    %v228 = vld [vmem:[#allocation8 + $0x18] sm:$0xff]
    %v229 = vld [vmem:[#allocation8 + $0x20] sm:$0xff]
    %v230 = vld [vmem:[#allocation8 + $0x28] sm:$0xff]
    %v231 = vld [vmem:[#allocation8 + $0x30] sm:$0xff]
    %v232 = vld [vmem:[#allocation8 + $0x38] sm:$0xff]
    %v233 = vld [vmem:[#allocation8 + $0x40] sm:$0xff]
    %v234 = vld [vmem:[#allocation8 + $0x48] sm:$0xff]
    %v235 = vld [vmem:[#allocation8 + $0x50] sm:$0xff]
    %v236 = vld [vmem:[#allocation8 + $0x58] sm:$0xff]
    %v237 = vld [vmem:[#allocation8 + $0x60] sm:$0xff]
    %v238 = vld [vmem:[#allocation8 + $0x68] sm:$0xff]
    %v239 = vld [vmem:[#allocation8 + $0x70] sm:$0xff]
    %v240 = vld [vmem:[#allocation8 + $0x78] sm:$0xff]
    %v241 = vld [vmem:[%s6] sm:$0x1]
    %v243 = vperm.slane %v241, 0
    %245 = vmatpush.msra.mxu0 %v240
    %246 = vmatpush.msra.mxu0 %v239
    %247 = vmatpush.msra.mxu0 %v238
    %248 = vmatpush.msra.mxu0 %v237
    %249 = vmatpush.msra.mxu0 %v236
    %250 = vmatpush.msra.mxu0 %v235
    %251 = vmatpush.msra.mxu0 %v234
    %252 = vmatpush.msra.mxu0 %v233
    %253 = vmatpush.msra.mxu0 %v232
    %254 = vmatpush.msra.mxu0 %v231
    %255 = vmatpush.msra.mxu0 %v230
    %256 = vmatpush.msra.mxu0 %v229
    %257 = vmatpush.msra.mxu0 %v228
    %258 = vmatpush.msra.mxu0 %v227
    %259 = vmatpush.msra.mxu0 %v226
    %260 = vmatpush.msra.mxu0 %v225
    %261 = vmatmul.f32.gmra.mxu0 %v223
    %v262 = vpop.f32.mrf.mxu0
    %v263 = vadd.f32 %v243, %v262
    %264 = vmatmul.f32.gmra.mxu0 %v224
    %v265 = vpop.f32.mrf.mxu0
    %v266 = vadd.f32 %v243, %v265
    %267 = vdwg.mxu0
    %v268 = vmax.f32 %v263, 0.0
    %v269 = vmax.f32 %v266, 0.0
    %v270 = vld [vmem:[#allocation10] sm:$0xff]
    %v271 = vld [vmem:[#allocation10 + $0x8] sm:$0xff]
    %v272 = vld [vmem:[#allocation10 + $0x10] sm:$0xff]
    %v273 = vld [vmem:[#allocation10 + $0x18] sm:$0xff]
    %v274 = vld [vmem:[#allocation10 + $0x20] sm:$0xff]
    %v275 = vld [vmem:[#allocation10 + $0x28] sm:$0xff]
    %v276 = vld [vmem:[#allocation10 + $0x30] sm:$0xff]
    %v277 = vld [vmem:[#allocation10 + $0x38] sm:$0xff]
    %v278 = vld [vmem:[#allocation10 + $0x40] sm:$0xff]
    %v279 = vld [vmem:[#allocation10 + $0x48] sm:$0xff]
    %v280 = vld [vmem:[#allocation10 + $0x50] sm:$0xff]
    %v281 = vld [vmem:[#allocation10 + $0x58] sm:$0xff]
    %v282 = vld [vmem:[#allocation10 + $0x60] sm:$0xff]
    %v283 = vld [vmem:[#allocation10 + $0x68] sm:$0xff]
    %v284 = vld [vmem:[#allocation10 + $0x70] sm:$0xff]
    %v285 = vld [vmem:[#allocation10 + $0x78] sm:$0xff]
    %v286 = vld [vmem:[%s8] sm:$0x1]
    %v288 = vperm.slane %v286, 0
    %290 = vmatpush.msra.mxu0 %v285
    %291 = vmatpush.msra.mxu0 %v284
    %292 = vmatpush.msra.mxu0 %v283
    %293 = vmatpush.msra.mxu0 %v282
    %294 = vmatpush.msra.mxu0 %v281
    %295 = vmatpush.msra.mxu0 %v280
    %296 = vmatpush.msra.mxu0 %v279
    %297 = vmatpush.msra.mxu0 %v278
    %298 = vmatpush.msra.mxu0 %v277
    %299 = vmatpush.msra.mxu0 %v276
    %300 = vmatpush.msra.mxu0 %v275
    %301 = vmatpush.msra.mxu0 %v274
    %302 = vmatpush.msra.mxu0 %v273
    %303 = vmatpush.msra.mxu0 %v272
    %304 = vmatpush.msra.mxu0 %v271
    %305 = vmatpush.msra.mxu0 %v270
    %306 = vmatmul.f32.gmra.mxu0 %v268
    %v307 = vpop.f32.mrf.mxu0
    %v308 = vadd.f32 %v288, %v307
    %309 = vmatmul.f32.gmra.mxu0 %v269
    %v310 = vpop.f32.mrf.mxu0
    %v311 = vadd.f32 %v288, %v310
    %312 = vdwg.mxu0
    %v313 = vmax.f32 %v308, 0.0
    %v314 = vmax.f32 %v311, 0.0
    %v315 = vld [vmem:[#allocation11] sm:$0xff]
    %v316 = vld [vmem:[#allocation11 + $0x8] sm:$0xff]
    %v317 = vld [vmem:[#allocation11 + $0x10] sm:$0xff]
    %v318 = vld [vmem:[#allocation11 + $0x18] sm:$0xff]
    %v319 = vld [vmem:[#allocation11 + $0x20] sm:$0xff]
    %v320 = vld [vmem:[#allocation11 + $0x28] sm:$0xff]
    %v321 = vld [vmem:[#allocation11 + $0x30] sm:$0xff]
    %v322 = vld [vmem:[#allocation11 + $0x38] sm:$0xff]
    %v323 = vld [vmem:[#allocation11 + $0x40] sm:$0xff]
    %v324 = vld [vmem:[#allocation11 + $0x48] sm:$0xff]
    %v325 = vld [vmem:[#allocation11 + $0x50] sm:$0xff]
    %v326 = vld [vmem:[#allocation11 + $0x58] sm:$0xff]
    %v327 = vld [vmem:[#allocation11 + $0x60] sm:$0xff]
    %v328 = vld [vmem:[#allocation11 + $0x68] sm:$0xff]
    %v329 = vld [vmem:[#allocation11 + $0x70] sm:$0xff]
    %v330 = vld [vmem:[#allocation11 + $0x78] sm:$0xff]
    %v331 = vld [vmem:[%s10] sm:$0x1]
    %v333 = vperm.slane %v331, 0
    %335 = vmatpush.msra.mxu0 %v330
    %336 = vmatpush.msra.mxu0 %v329
    %337 = vmatpush.msra.mxu0 %v328
    %338 = vmatpush.msra.mxu0 %v327
    %339 = vmatpush.msra.mxu0 %v326
    %340 = vmatpush.msra.mxu0 %v325
    %341 = vmatpush.msra.mxu0 %v324
    %342 = vmatpush.msra.mxu0 %v323
    %343 = vmatpush.msra.mxu0 %v322
    %344 = vmatpush.msra.mxu0 %v321
    %345 = vmatpush.msra.mxu0 %v320
    %346 = vmatpush.msra.mxu0 %v319
    %347 = vmatpush.msra.mxu0 %v318
    %348 = vmatpush.msra.mxu0 %v317
    %349 = vmatpush.msra.mxu0 %v316
    %350 = vmatpush.msra.mxu0 %v315
    %351 = vmatmul.f32.gmra.mxu0 %v313
    %v352 = vpop.f32.mrf.mxu0
    %v353 = vadd.f32 %v333, %v352
    %354 = vmatmul.f32.gmra.mxu0 %v314
    %v355 = vpop.f32.mrf.mxu0
    %v356 = vadd.f32 %v333, %v355
    %357 = vdwg.mxu0
    %358 = vst [vmem:[#allocation13] sm:$0xff] %v353
    %359 = vst [vmem:[#allocation13 + $0x8] sm:$0xff] %v356
    // Predicated region
    $region70: #{tpu_custom_call.1} parent=1 // pred_check
      _
    $region71: #{tpu_custom_call.1} parent=1 // pred_check_branch
      %361 = sbr.rel (0) target = $region73
    $region72: #{tpu_custom_call.1} parent=1 // pred_region
      %363 = vsyncadd [#allocation4], 0
      %s364 = sshll.u32 [#allocation13], 4
      %s365 = int_to_ptr.vmem [resolvable:$true] %s364
      %s366 = sshll.u32 %s11, 4
      %s367 = int_to_ptr.hbm [resolvable:$true] %s366
      %372 = dma.vmem_to_hbm [thread:$0]  %s365, 256, %s367, [#allocation4], 128, 128, 8
    $region73: #{tpu_custom_call.1} parent=1 // pred_fallthru
      _
    // Predicated region
    $region74: #{tpu_custom_call.1} parent=1 // pred_check
      _
    $region75: #{tpu_custom_call.1} parent=1 // pred_check_branch
      %374 = sbr.rel (0) target = $region77
    $region76: #{tpu_custom_call.1} parent=1 // pred_region
      %376 = dma.done [#allocation4], 256
    $region77: #{tpu_custom_call.1} parent=1 // pred_fallthru
      _
    %377 = vsyncpa [#allocation3], 1
    %378 = vsyncpa [#allocation6], 1
    %379 = vsyncpa [#allocation9], 1
    %380 = vsyncpa [#allocation12], 1
    %381 = vsyncpa [#allocation4], 1

</llo_original>
